<compile_context>
chip_gen: v6e
topology: v6e:2x2x1
jax: 0.10.0
libtpu: 0.0.40
codegen_flags: <defaults>
</compile_context>

<pallas_src>
import functools

import jax
import jax.numpy as jnp
from jax.experimental import pallas as pl
from jax.experimental.pallas import tpu as pltpu


# --------------------------------------------------------------------------- helpers

def _lane_tile(hwp, bytes_per_lane, *, max_tile=2048, budget=24 << 20, min_steps=1):
    """Largest multiple-of-128 divisor of hwp that fits the VMEM budget and keeps at
    least `min_steps` grid steps along the lane axis.  hwp must be a multiple of 128."""
    cap = (budget // max(bytes_per_lane, 1)) // 128 * 128
    cap = max(128, min(max_tile, cap))
    if min_steps > 1:
        cap = min(cap, max(128, (hwp // min_steps) // 128 * 128))
    t = min(cap, hwp)
    t -= t % 128
    t = max(t, 128)
    while hwp % t != 0:          # hwp is a multiple of 128 -> terminates at t == 128
        t -= 128
    return t


def _pad_hw(xr, hw, hwp):
    if hwp == hw:
        return xr
    return jnp.pad(xr, ((0, 0), (0, 0), (0, hwp - hw)))


def _stats(x):
    """Single-pass channel statistics on a (C, TL) f32 tile."""
    mean = jnp.mean(x, axis=0, keepdims=True)                       # (1, TL)
    ex2 = jnp.mean(x * x, axis=0, keepdims=True)
    var = jnp.maximum(ex2 - mean * mean, 0.0)                       # unbiased=False
    return mean, var


_CPARAMS = pltpu.CompilerParams(
    dimension_semantics=("parallel", "parallel"),
    vmem_limit_bytes=48 * 1024 * 1024,
)


# ----------------------------------------------- standalone channel LayerNorm kernel

def _ln_channel_kernel(x_ref, g_ref, b_ref, o_ref, *, eps):
    x = x_ref[0].astype(jnp.float32)                                # (C, TL) f32
    mean, var = _stats(x)
    inv = pl.reciprocal(jnp.sqrt(var) + eps, approx=False)          # exact: tight path
    o_ref[0] = ((x - mean) * inv * g_ref[...] + b_ref[...]).astype(o_ref.dtype)


def layernorm_nchw(x, g, b, eps=1e-5):
    """Channel LayerNorm on an NCHW tensor.  Channels on sublanes, H*W on lanes."""
    B, C, H, W = x.shape
    HW = H * W
    HWp = -(-HW // 128) * 128
    xr = _pad_hw(x.reshape(B, C, HW), HW, HWp)                      # native dtype in

    bytes_per_lane = 2 * C * xr.dtype.itemsize + 2 * C * x.dtype.itemsize
    TL = _lane_tile(HWp, bytes_per_lane, min_steps=2 if B == 1 else 1)

    out = pl.pallas_call(
        functools.partial(_ln_channel_kernel, eps=eps),
        out_shape=jax.ShapeDtypeStruct((B, C, HWp), x.dtype),
        grid=(B, HWp // TL),
        in_specs=[pl.BlockSpec((1, C, TL), lambda i, j: (i, 0, j)),
                  pl.BlockSpec((C, 1), lambda i, j: (0, 0)),
                  pl.BlockSpec((C, 1), lambda i, j: (0, 0))],
        out_specs=pl.BlockSpec((1, C, TL), lambda i, j: (i, 0, j)),
        compiler_params=_CPARAMS,
    )(xr,
      g.reshape(C, 1).astype(jnp.float32),
      b.reshape(C, 1).astype(jnp.float32))
    return out[:, :, :HW].reshape(B, C, H, W)


def prenorm(x, g, b, fn, eps=1e-5, **kwargs):
    """General PreNorm: Pallas channel-LayerNorm, then arbitrary fn (plain JAX)."""
    return fn(layernorm_nchw(x, g, b, eps=eps), **kwargs)


# ------------------------------- fused PreNorm + pointwise (1x1-conv) projection ----

def _prenorm_pw_kernel(x_ref, w_ref, bias_ref, o_ref, *, eps):
    x = x_ref[0].astype(jnp.float32)                                # (C, TL) f32
    mean, var = _stats(x)
    inv = pl.reciprocal(jnp.sqrt(var) + eps, approx=True)           # EUP, 1 x TL
    xn = ((x - mean) * inv).astype(jnp.bfloat16)                    # g/b folded into w/bias
    acc = jnp.dot(w_ref[...], xn, preferred_element_type=jnp.float32)   # bf16 MXU, f32 acc
    o_ref[0] = (acc + bias_ref[...]).astype(o_ref.dtype)            # bf16 writeback


def prenorm_pointwise(x, g, b, w, bias=None, eps=1e-5):
    """Fused PreNorm(dim, pointwise-projection): the channel LayerNorm is computed on
    the x-tile inside the projection kernel (no HBM round trip of the normalized
    activation).  LayerNorm affine is folded into (w, bias) on the host.
    x: (B, C, H, W), w: (Cout, C), bias: (Cout,) or None.  Returns (B, Cout, H, W) bf16."""
    B, C, H, W = x.shape
    Cout = w.shape[0]
    HW = H * W
    HWp = -(-HW // 128) * 128

    gC = g.reshape(C).astype(jnp.float32)
    bC = b.reshape(C).astype(jnp.float32)
    wf32 = w.reshape(Cout, C).astype(jnp.float32)
    # w @ (xn * g + b) == (w * g) @ xn + w @ b   (exact algebraic fold)
    w_folded = (wf32 * gC[None, :]).astype(jnp.bfloat16)
    bias_folded = wf32 @ bC
    if bias is not None:
        bias_folded = bias_folded + bias.reshape(Cout).astype(jnp.float32)
    bias_folded = bias_folded.reshape(Cout, 1)

    xr = _pad_hw(x.reshape(B, C, HW), HW, HWp)                      # native dtype in

    bytes_per_lane = 2 * C * xr.dtype.itemsize + 2 * Cout * 2       # dbl-buf in + bf16 out
    TL = _lane_tile(HWp, bytes_per_lane, min_steps=2 if B == 1 else 1)

    out = pl.pallas_call(
        functools.partial(_prenorm_pw_kernel, eps=eps),
        out_shape=jax.ShapeDtypeStruct((B, Cout, HWp), jnp.bfloat16),
        grid=(B, HWp // TL),
        in_specs=[pl.BlockSpec((1, C, TL), lambda i, j: (i, 0, j)),
                  pl.BlockSpec((Cout, C), lambda i, j: (0, 0)),
                  pl.BlockSpec((Cout, 1), lambda i, j: (0, 0))],
        out_specs=pl.BlockSpec((1, Cout, TL), lambda i, j: (i, 0, j)),
        compiler_params=_CPARAMS,
    )(xr, w_folded, bias_folded)
    return out[:, :, :HW].reshape(B, Cout, H, W)


def prenorm_pointwise_stacked(x, g, b, ws, biases=None, eps=1e-5):
    """Fuse several pointwise consumers of one PreNorm (to_q/to_k/to_v, FF-w1):
    one x read + one LayerNorm; stacked (sum(Cout), C) weight fills the wide MXU."""
    couts = [int(wi.shape[0]) for wi in ws]
    w = jnp.concatenate([wi for wi in ws], axis=0)
    if biases is None:
        bias = None
    else:
        bias = jnp.concatenate(
            [bi.reshape(co) if bi is not None else jnp.zeros((co,), jnp.float32)
             for co, bi in zip(couts, biases)], axis=0)
    out = prenorm_pointwise(x, g, b, w, bias, eps=eps)
    outs, s = [], 0
    for co in couts:
        outs.append(out[:, s:s + co])
        s += co
    return outs


# --------------------------------------------------------------------------- main

if __name__ == "__main__":
    key = jax.random.PRNGKey(0)
    kx, kg, kb, kq, kk, kv, kbq = jax.random.split(key, 7)

    # Small shapes consistent with a CvT stage: NCHW activations, channel LayerNorm,
    # pointwise projection consumers (to_q / to_k / to_v).
    B, C, H, W = 2, 32, 32, 32          # HW = 1024 -> lane tile 1024, grid (2, 1)
    Dh = 64                             # per-projection width

    x = jax.random.normal(kx, (B, C, H, W), jnp.float32)
    g = 1.0 + 0.1 * jax.random.normal(kg, (1, C, 1, 1), jnp.float32)   # LayerNorm.g
    b = 0.1 * jax.random.normal(kb, (1, C, 1, 1), jnp.float32)         # LayerNorm.b
    wq = 0.05 * jax.random.normal(kq, (Dh, C), jnp.float32)
    wk = 0.05 * jax.random.normal(kk, (Dh, C), jnp.float32)
    wv = 0.05 * jax.random.normal(kv, (Dh, C), jnp.float32)
    bq = 0.05 * jax.random.normal(kbq, (Dh,), jnp.float32)

    # ---- pure-JAX reference (matches the PyTorch module semantics) ----------------
    def ref_layernorm(t, g, b, eps=1e-5):
        mean = jnp.mean(t, axis=1, keepdims=True)
        var = jnp.mean((t - mean) ** 2, axis=1, keepdims=True)          # unbiased=False
        return (t - mean) / (jnp.sqrt(var) + eps) * g + b

    def ref_pointwise(xn, w, bias=None):
        out = jnp.einsum('bchw,oc->bohw', xn, w)
        return out if bias is None else out + bias.reshape(1, -1, 1, 1)

    ref_ln = ref_layernorm(x, g, b)

    # ---- 1) standalone Pallas LayerNorm + general PreNorm path --------------------
    ln = jax.block_until_ready(jax.jit(lambda t: layernorm_nchw(t, g, b))(x))
    assert ln.shape == (B, C, H, W), ln.shape
    assert jnp.allclose(ln, ref_ln, atol=1e-4, rtol=1e-4)

    out_general = jax.block_until_ready(
        jax.jit(lambda t: prenorm(t, g, b, lambda xn: ref_pointwise(xn, wq, bq)))(x))
    assert jnp.allclose(out_general, ref_pointwise(ref_ln, wq, bq), atol=1e-3, rtol=1e-3)

    # ---- 2) fused PreNorm + pointwise projection (bias / no-bias, bf16 out) -------
    out_q = jax.block_until_ready(jax.jit(lambda t: prenorm_pointwise(t, g, b, wq, bq))(x))
    out_k = jax.block_until_ready(jax.jit(lambda t: prenorm_pointwise(t, g, b, wk, None))(x))
    assert out_q.shape == (B, Dh, H, W) and out_q.dtype == jnp.bfloat16
    assert jnp.allclose(out_q.astype(jnp.float32), ref_pointwise(ref_ln, wq, bq),
                        atol=2e-2, rtol=2e-2)
    assert jnp.allclose(out_k.astype(jnp.float32), ref_pointwise(ref_ln, wk),
                        atol=2e-2, rtol=2e-2)

    # ---- 3) fused PreNorm + stacked q/k/v consumers (one LN, one x read) ----------
    q_o, k_o, v_o = jax.block_until_ready(jax.jit(
        lambda t: tuple(prenorm_pointwise_stacked(t, g, b, [wq, wk, wv],
                                                  [bq, None, None])))(x))
    assert jnp.allclose(q_o.astype(jnp.float32), ref_pointwise(ref_ln, wq, bq),
                        atol=2e-2, rtol=2e-2)
    assert jnp.allclose(k_o.astype(jnp.float32), ref_pointwise(ref_ln, wk),
                        atol=2e-2, rtol=2e-2)
    assert jnp.allclose(v_o.astype(jnp.float32), ref_pointwise(ref_ln, wv),
                        atol=2e-2, rtol=2e-2)

    # ---- 4) non-128-multiple spatial (real CvT: 14x14) -> padded lane tiling ------
    x14 = jax.random.normal(kx, (B, C, 14, 14), jnp.float32)
    ln14 = jax.block_until_ready(jax.jit(lambda t: layernorm_nchw(t, g, b))(x14))
    assert jnp.allclose(ln14, ref_layernorm(x14, g, b), atol=1e-4, rtol=1e-4)
    out14 = jax.block_until_ready(jax.jit(lambda t: prenorm_pointwise(t, g, b, wq, bq))(x14))
    assert jnp.allclose(out14.astype(jnp.float32),
                        ref_pointwise(ref_layernorm(x14, g, b), wq, bq),
                        atol=2e-2, rtol=2e-2)

    # ---- 5) native-dtype (bf16) activations: no wrapper upcast, f32 LN in-kernel --
    xbf = x.astype(jnp.bfloat16)
    out_bf = jax.block_until_ready(jax.jit(lambda t: prenorm_pointwise(t, g, b, wq, bq))(xbf))
    assert jnp.allclose(out_bf.astype(jnp.float32), ref_pointwise(ref_ln, wq, bq),
                        atol=5e-2, rtol=5e-2)

    assert bool(jnp.all(jnp.isfinite(out_q.astype(jnp.float32))))
    print("KERNEL_OK")
</pallas_src>

<mosaic_0001>
module attributes {stable_mosaic.version = 11 : i64} {
  func.func @_ln_channel_kernel(%arg0: i32, %arg1: i32, %arg2: memref<1x32x1024xf32, #tpu.memory_space<vmem>>, %arg3: memref<32x1xf32, #tpu.memory_space<vmem>>, %arg4: memref<32x1xf32, #tpu.memory_space<vmem>>, %arg5: memref<1x32x1024xf32, #tpu.memory_space<vmem>>) attributes {dimension_semantics = [#tpu.dimension_semantics<parallel>, #tpu.dimension_semantics<parallel>], iteration_bounds = array<i64: 2, 1>, scalar_prefetch = 0 : i64, scratch_operands = 0 : i64, tpu.core_type = #tpu.core_type<tc>, window_params = [{transform_indices = @transform_0, window_bounds = array<i64: 1, 32, 1024>}, {pipeline_mode = #tpu.pipeline_mode<synchronous>, transform_indices = @transform_1, window_bounds = array<i64: 32, 1>}, {pipeline_mode = #tpu.pipeline_mode<synchronous>, transform_indices = @transform_2, window_bounds = array<i64: 32, 1>}, {transform_indices = @transform_3, window_bounds = array<i64: 1, 32, 1024>}]} {
    %c0 = arith.constant 0 : index
    %c0_0 = arith.constant 0 : index
    %c0_1 = arith.constant 0 : index
    %0 = vector.load %arg2[%c0, %c0_0, %c0_1] : memref<1x32x1024xf32, #tpu.memory_space<vmem>>, vector<1x32x1024xf32>
    %1 = vector.shape_cast %0 : vector<1x32x1024xf32> to vector<32x1024xf32>
    %cst = arith.constant dense<0.000000e+00> : vector<1024xf32>
    %2 = vector.multi_reduction <add>, %1, %cst [0] : vector<32x1024xf32> to vector<1024xf32>
    %3 = vector.shape_cast %2 : vector<1024xf32> to vector<1x1024xf32>
    %cst_2 = arith.constant 3.200000e+01 : f32
    %4 = vector.broadcast %cst_2 : f32 to vector<1x1024xf32>
    %5 = arith.divf %3, %4 : vector<1x1024xf32>
    %6 = arith.mulf %1, %1 : vector<32x1024xf32>
    %cst_3 = arith.constant dense<0.000000e+00> : vector<1024xf32>
    %7 = vector.multi_reduction <add>, %6, %cst_3 [0] : vector<32x1024xf32> to vector<1024xf32>
    %8 = vector.shape_cast %7 : vector<1024xf32> to vector<1x1024xf32>
    %cst_4 = arith.constant 3.200000e+01 : f32
    %9 = vector.broadcast %cst_4 : f32 to vector<1x1024xf32>
    %10 = arith.divf %8, %9 : vector<1x1024xf32>
    %11 = arith.mulf %5, %5 : vector<1x1024xf32>
    %12 = arith.subf %10, %11 : vector<1x1024xf32>
    %cst_5 = arith.constant 0.000000e+00 : f32
    %13 = vector.broadcast %cst_5 : f32 to vector<1x1024xf32>
    %14 = arith.maximumf %12, %13 : vector<1x1024xf32>
    %15 = math.sqrt %14 : vector<1x1024xf32>
    %cst_6 = arith.constant 9.99999974E-6 : f32
    %16 = vector.broadcast %cst_6 : f32 to vector<1x1024xf32>
    %17 = arith.addf %15, %16 : vector<1x1024xf32>
    %18 = tpu.reciprocal %17 : vector<1x1024xf32> -> vector<1x1024xf32>
    %19 = vector.broadcast %5 : vector<1x1024xf32> to vector<32x1024xf32>
    %20 = arith.subf %1, %19 : vector<32x1024xf32>
    %21 = vector.broadcast %18 : vector<1x1024xf32> to vector<32x1024xf32>
    %22 = arith.mulf %20, %21 : vector<32x1024xf32>
    %c0_7 = arith.constant 0 : index
    %c0_8 = arith.constant 0 : index
    %23 = vector.load %arg3[%c0_7, %c0_8] : memref<32x1xf32, #tpu.memory_space<vmem>>, vector<32x1xf32>
    %24 = vector.broadcast %23 : vector<32x1xf32> to vector<32x1024xf32>
    %25 = arith.mulf %22, %24 : vector<32x1024xf32>
    %c0_9 = arith.constant 0 : index
    %c0_10 = arith.constant 0 : index
    %26 = vector.load %arg4[%c0_9, %c0_10] : memref<32x1xf32, #tpu.memory_space<vmem>>, vector<32x1xf32>
    %27 = vector.broadcast %26 : vector<32x1xf32> to vector<32x1024xf32>
    %28 = arith.addf %25, %27 : vector<32x1024xf32>
    %c0_11 = arith.constant 0 : index
    %c0_12 = arith.constant 0 : index
    %c0_13 = arith.constant 0 : index
    %29 = vector.load %arg5[%c0_11, %c0_12, %c0_13] : memref<1x32x1024xf32, #tpu.memory_space<vmem>>, vector<1x32x1024xf32>
    %30 = vector.shape_cast %29 : vector<1x32x1024xf32> to vector<32x1024xf32>
    %31 = vector.shape_cast %28 : vector<32x1024xf32> to vector<1x32x1024xf32>
    tpu.vector_store %arg5[%c0_11, %c0_12, %c0_13], %31 {strides = array<i32>} : memref<1x32x1024xf32, #tpu.memory_space<vmem>>, vector<1x32x1024xf32>,
    return
  }
  func.func @transform_0(%arg0: i32, %arg1: i32) -> (i32, i32, i32) {
    %c0_i32 = arith.constant 0 : i32
    %c0_i32_0 = arith.constant 0 : i32
    return %arg0, %c0_i32, %arg1 : i32, i32, i32
  }
  func.func @transform_1(%arg0: i32, %arg1: i32) -> (i32, i32) {
    %c0_i32 = arith.constant 0 : i32
    %c0_i32_0 = arith.constant 0 : i32
    %c0_i32_1 = arith.constant 0 : i32
    return %c0_i32, %c0_i32_0 : i32, i32
  }
  func.func @transform_2(%arg0: i32, %arg1: i32) -> (i32, i32) {
    %c0_i32 = arith.constant 0 : i32
    %c0_i32_0 = arith.constant 0 : i32
    %c0_i32_1 = arith.constant 0 : i32
    return %c0_i32, %c0_i32_0 : i32, i32
  }
  func.func @transform_3(%arg0: i32, %arg1: i32) -> (i32, i32, i32) {
    %c0_i32 = arith.constant 0 : i32
    %c0_i32_0 = arith.constant 0 : i32
    return %arg0, %c0_i32, %arg1 : i32, i32, i32
  }
}

</mosaic_0001>

<llo_original>
// kernel: _lambda_.1
$region0: #{_lambda_.1}
  #allocation0 [shape = 'u32[]', space=smem, size = 0x4, offset = 0x4, fixed_abs, tag = 'smem constant byte address 0x4 - core index']
  #allocation1 [shape = 'u32[144,128]{1,0:T(1,128)}', space=vmem, size = 0x12000, scoped, tag = 'internal scratch']
  %s0 = inlined_call_operand.vmem [shape: f32[2,32,1024], index: 0, kind: input, shape index: {}]
  %s1 = inlined_call_operand.vmem [shape: f32[32,1], index: 1, kind: input, shape index: {}]
  %s2 = inlined_call_operand.vmem [shape: f32[32,1], index: 2, kind: input, shape index: {}]
  %s3 = inlined_call_operand.vmem [shape: f32[2,32,1024], index: 3, kind: output, shape index: {}]
  %s4 = sld [smem:[#allocation0]]
  $region45: #{_lambda_.1} parent=0
    _
  %s6 = ssub.s32 1, %s4
  %s7 = scalar_select 0, %s6, %s4
  loop: start=0, step=1, limit=4
  $region2: #{_lambda_.1} parent=0 // loop_pre_header
    _
  $region3: #{_lambda_.1} parent=0 // loop_header
    %s9 = sphi 0, %s13
    %p10 = scmp.ge.s32.totalorder %s9, 4
    %s16 = sphi 0, %s28
    %s17 = sphi 0, %s24
    %s18 = sphi 0, %s16
    %s19 = sphi 0, %s17
    %s20 = sphi 0, %s18
    %s21 = sphi 0, %s19
    %s33 = sphi 0, %s35
    %s36 = sphi 0, %s33
    %s37 = sphi 0, %s36
    %s53 = sphi 0, %s37
    %s57 = sphi 0, %s57
    %s59 = sphi 0, %s57
    %s60 = sphi 0, %s59
    %s74 = sphi 0, %s60
    %s78 = sphi 0, %s78
    %s80 = sphi 0, %s78
    %s81 = sphi 0, %s80
    %s95 = sphi 0, %s81
    %s103 = sphi 0, %s105
    %s106 = sphi 0, %s103
    %s107 = sphi 0, %s106
    %s123 = sphi 0, %s107
  $region4: #{_lambda_.1} parent=0 // loop_header_branch
    %12 = sbr.rel (%p10) target = $region8
  $region5: #{_lambda_.1} parent=0 // loop_body
    %s14 = ssub.s32 %s9, 1
    %s15 = ssub.s32 %s9, 2
    %s22 = sadd.s32 1, %s17
    %p23 = scmp.ge.s32.totalorder %s22, 1
    %s24 = scalar_select %p23, 0, %s22
    %s25 = sadd.s32 1, %s16
    %s26 = scalar_select %p23, %s25, %s16
    %p27 = scmp.ge.s32.totalorder %s26, 2
    %s28 = scalar_select %p27, 0, %s26
    %s29 = ssub.s32 %s16, %s28
    %s30 = ssub.s32 %s17, %s24
    %s31 = sor.u32 %s29, %s30
    %p32 = scmp.eq.s32.totalorder %s31, 0
    %s34 = sadd.s32 %s33, 1
    %s35 = scalar_select %p32, %s33, %s34
    %p38 = pneg %p32
    %p39 = scmp.eq.s32.totalorder %s9, 1
    %p40 = por %p38, %p39
    %p41 = scmp.ne.s32.totalorder %s33, %s36
    %p42 = scmp.eq.s32.totalorder %s9, 0
    %p43 = por %p41, %p42
    %p44 = scmp.ne.s32.totalorder %s33, %s36
    %p45 = scmp.eq.s32.totalorder %s14, 1
    %p46 = por %p44, %p45
    %p47 = scmp.ne.s32.totalorder %s36, %s37
    %p48 = scmp.eq.s32.totalorder %s14, 0
    %p49 = por %p47, %p48
    %p50 = scmp.ne.s32.totalorder %s36, %s37
    %p51 = scmp.eq.s32.totalorder %s15, 1
    %p52 = por %p50, %p51
    %p54 = scmp.ne.s32.totalorder %s37, %s53
    %p55 = scmp.eq.s32.totalorder %s15, 0
    %p56 = por %p54, %p55
    %s58 = sadd.s32 %s57, 1
    %p61 = scmp.eq.s32.totalorder %s9, 1
    %p62 = scmp.ne.s32.totalorder %s57, %s59
    %p63 = scmp.eq.s32.totalorder %s9, 0
    %p64 = por %p62, %p63
    %p65 = scmp.ne.s32.totalorder %s57, %s59
    %p66 = scmp.eq.s32.totalorder %s14, 1
    %p67 = por %p65, %p66
    %p68 = scmp.ne.s32.totalorder %s59, %s60
    %p69 = scmp.eq.s32.totalorder %s14, 0
    %p70 = por %p68, %p69
    %p71 = scmp.ne.s32.totalorder %s59, %s60
    %p72 = scmp.eq.s32.totalorder %s15, 1
    %p73 = por %p71, %p72
    %p75 = scmp.ne.s32.totalorder %s60, %s74
    %p76 = scmp.eq.s32.totalorder %s15, 0
    %p77 = por %p75, %p76
    %s79 = sadd.s32 %s78, 1
    %p82 = scmp.eq.s32.totalorder %s9, 1
    %p83 = scmp.ne.s32.totalorder %s78, %s80
    %p84 = scmp.eq.s32.totalorder %s9, 0
    %p85 = por %p83, %p84
    %p86 = scmp.ne.s32.totalorder %s78, %s80
    %p87 = scmp.eq.s32.totalorder %s14, 1
    %p88 = por %p86, %p87
    %p89 = scmp.ne.s32.totalorder %s80, %s81
    %p90 = scmp.eq.s32.totalorder %s14, 0
    %p91 = por %p89, %p90
    %p92 = scmp.ne.s32.totalorder %s80, %s81
    %p93 = scmp.eq.s32.totalorder %s15, 1
    %p94 = por %p92, %p93
    %p96 = scmp.ne.s32.totalorder %s81, %s95
    %p97 = scmp.eq.s32.totalorder %s15, 0
    %p98 = por %p96, %p97
    %s99 = ssub.s32 %s16, %s28
    %s100 = ssub.s32 %s17, %s24
    %s101 = sor.u32 %s99, %s100
    %p102 = scmp.eq.s32.totalorder %s101, 0
    %s104 = sadd.s32 %s103, 1
    %s105 = scalar_select %p102, %s103, %s104
    %p108 = pneg %p102
    %p109 = scmp.eq.s32.totalorder %s9, 1
    %p110 = por %p108, %p109
    %p111 = scmp.ne.s32.totalorder %s103, %s106
    %p112 = scmp.eq.s32.totalorder %s9, 0
    %p113 = por %p111, %p112
    %p114 = scmp.ne.s32.totalorder %s103, %s106
    %p115 = scmp.eq.s32.totalorder %s14, 1
    %p116 = por %p114, %p115
    %p117 = scmp.ne.s32.totalorder %s106, %s107
    %p118 = scmp.eq.s32.totalorder %s14, 0
    %p119 = por %p117, %p118
    %p120 = scmp.ne.s32.totalorder %s106, %s107
    %p121 = scmp.eq.s32.totalorder %s15, 1
    %p122 = por %p120, %p121
    %p124 = scmp.ne.s32.totalorder %s107, %s123
    %p125 = scmp.eq.s32.totalorder %s15, 0
    %p126 = por %p124, %p125
    %p127 = scmp.le.s32.totalorder 1, %s9
    %p128 = scmp.lt.s32.totalorder %s9, 3
    %p129 = pnand %p127, %p128
    %p130 = pneg %p129
    // Predicated region
    $region9: #{_lambda_.1} parent=5 // pred_check
      _
    $region10: #{_lambda_.1} parent=5 // pred_check_branch
      %132 = sbr.rel (%p129) target = $region12
    $region11: #{_lambda_.1} parent=5 // pred_region
      %s133 = ssub.s32 %s9, 1
      // Predicated region
      $region13: #{_lambda_.1} parent=11 // pred_check
        %p134 = pneg %p70
      $region14: #{_lambda_.1} parent=11 // pred_check_branch
        %136 = sbr.rel (%p134) target = $region16
      $region15: #{_lambda_.1} parent=11 // pred_region
        _
      $region16: #{_lambda_.1} parent=11 // pred_fallthru
        _
      // Predicated region
      $region17: #{_lambda_.1} parent=11 // pred_check
        %p137 = pneg %p91
      $region18: #{_lambda_.1} parent=11 // pred_check_branch
        %139 = sbr.rel (%p137) target = $region20
      $region19: #{_lambda_.1} parent=11 // pred_region
        _
      $region20: #{_lambda_.1} parent=11 // pred_fallthru
        _
    $region12: #{_lambda_.1} parent=5 // pred_fallthru
      _
    %p140 = scmp.lt.s32.totalorder %s9, 2
    // Predicated region
    $region21: #{_lambda_.1} parent=5 // pred_check
      %p141 = pneg %p140
    $region22: #{_lambda_.1} parent=5 // pred_check_branch
      %143 = sbr.rel (%p141) target = $region24
    $region23: #{_lambda_.1} parent=5 // pred_region
      // Predicated region
      $region25: #{_lambda_.1} parent=23 // pred_check
        %p144 = pneg %p43
      $region26: #{_lambda_.1} parent=23 // pred_check_branch
        %146 = sbr.rel (%p144) target = $region28
      $region27: #{_lambda_.1} parent=23 // pred_region
        %s147 = smul.u32 8, %s17
        %p148 = scmp.lt.s32.totalorder %s16, 1
        %s149 = scalar_select %p148, %s16, 1
        %p150 = scmp.lt.s32.totalorder %s147, 7
        %s151 = scalar_select %p150, %s147, 7
        %s152 = smul.addr %s149, 32
        %s153 = sadd.s32 %s151, %s152
        %s154 = smul.addr %s153, 8
        %s155 = scalar_lea.vmem %s0, %s154
        %s156 = smul.u32 8, %s17
      $region28: #{_lambda_.1} parent=23 // pred_fallthru
        _
    $region24: #{_lambda_.1} parent=5 // pred_fallthru
      _
    %p157 = scmp.le.s32.totalorder 1, %s9
    %p158 = scmp.lt.s32.totalorder %s9, 3
    %p159 = pnand %p157, %p158
    %p160 = pneg %p159
    // Predicated region
    $region29: #{_lambda_.1} parent=5 // pred_check
      _
    $region30: #{_lambda_.1} parent=5 // pred_check_branch
      %162 = sbr.rel (%p159) target = $region32
    $region31: #{_lambda_.1} parent=5 // pred_region
      %s163 = ssub.s32 %s9, 1
      %s164 = smul.u32 8, %s19
      %p165 = scmp.lt.s32.totalorder %s18, 1
      %s166 = scalar_select %p165, %s18, 1
      %p167 = scmp.lt.s32.totalorder %s164, 7
      %s168 = scalar_select %p167, %s164, 7
      %s169 = smul.addr %s166, 32
      %s170 = sadd.s32 %s168, %s169
      %s171 = smul.addr %s170, 8
      %s172 = scalar_lea.vmem %s0, %s171
      %p173 = pneg %p49
      %p174 = pneg %p46
      %p175 = pneg %p70
      %p176 = pneg %p67
      %p177 = pneg %p91
      %p178 = pneg %p88
      %p179 = pneg %p119
      %p180 = pneg %p116
      %s181 = smul.u32 8, %s19
      %p182 = scmp.lt.s32.totalorder %s18, 1
      %s183 = scalar_select %p182, %s18, 1
      %p184 = scmp.lt.s32.totalorder %s181, 7
      %s185 = scalar_select %p184, %s181, 7
      %s186 = smul.addr %s183, 32
      %s187 = sadd.s32 %s185, %s186
      %s188 = smul.addr %s187, 8
      %s189 = scalar_lea.vmem %s3, %s188
      %s190 = smul.u32 8, %s19
      %p191 = scmp.lt.s32.totalorder %s18, 1
      %s192 = scalar_select %p191, %s18, 1
      %p193 = scmp.lt.s32.totalorder %s190, 7
      %s194 = scalar_select %p193, %s190, 7
      %s195 = smul.addr %s192, 32
      %s196 = sadd.s32 %s194, %s195
      %s197 = smul.addr %s196, 8
      %s198 = scalar_lea.vmem %s0, %s197
      %s199 = smul.u32 8, %s19
      %s200 = smul.u32 8, %s19
      %p201 = scmp.lt.s32.totalorder %s18, 1
      %s202 = scalar_select %p201, %s18, 1
      %p203 = scmp.lt.s32.totalorder %s200, 7
      %s204 = scalar_select %p203, %s200, 7
      %s205 = smul.addr %s202, 32
      %s206 = sadd.s32 %s204, %s205
      %s207 = smul.addr %s206, 8
      %s208 = scalar_lea.vmem %s3, %s207
      %s209 = smul.u32 8, %s19
      %v210 = vld [vmem:[%s198] sm:$0xff]
      %v211 = vld [vmem:[%s198 + $0x8] sm:$0xff]
      %v212 = vld [vmem:[%s198 + $0x10] sm:$0xff]
      %v213 = vld [vmem:[%s198 + $0x18] sm:$0xff]
      %v214 = vld [vmem:[%s198 + $0x20] sm:$0xff]
      %v215 = vld [vmem:[%s198 + $0x28] sm:$0xff]
      %v216 = vld [vmem:[%s198 + $0x30] sm:$0xff]
      %v217 = vld [vmem:[%s198 + $0x38] sm:$0xff]
      %v218 = vld [vmem:[%s198 + $0x40] sm:$0xff]
      %v219 = vld [vmem:[%s198 + $0x48] sm:$0xff]
      %v220 = vld [vmem:[%s198 + $0x50] sm:$0xff]
      %v221 = vld [vmem:[%s198 + $0x58] sm:$0xff]
      %v222 = vld [vmem:[%s198 + $0x60] sm:$0xff]
      %v223 = vld [vmem:[%s198 + $0x68] sm:$0xff]
      %v224 = vld [vmem:[%s198 + $0x70] sm:$0xff]
      %v225 = vld [vmem:[%s198 + $0x78] sm:$0xff]
      %v226 = vld [vmem:[%s198 + $0x80] sm:$0xff]
      %v227 = vld [vmem:[%s198 + $0x88] sm:$0xff]
      %v228 = vld [vmem:[%s198 + $0x90] sm:$0xff]
      %v229 = vld [vmem:[%s198 + $0x98] sm:$0xff]
      %v230 = vld [vmem:[%s198 + $0xa0] sm:$0xff]
      %v231 = vld [vmem:[%s198 + $0xa8] sm:$0xff]
      %v232 = vld [vmem:[%s198 + $0xb0] sm:$0xff]
      %v233 = vld [vmem:[%s198 + $0xb8] sm:$0xff]
      %v234 = vld [vmem:[%s198 + $0xc0] sm:$0xff]
      %v235 = vld [vmem:[%s198 + $0xc8] sm:$0xff]
      %v236 = vld [vmem:[%s198 + $0xd0] sm:$0xff]
      %v237 = vld [vmem:[%s198 + $0xd8] sm:$0xff]
      %v238 = vld [vmem:[%s198 + $0xe0] sm:$0xff]
      %v239 = vld [vmem:[%s198 + $0xe8] sm:$0xff]
      %v240 = vld [vmem:[%s198 + $0xf0] sm:$0xff]
      %v241 = vld [vmem:[%s198 + $0xf8] sm:$0xff]
      %v242 = vadd.f32 %v210, %v218
      %v243 = vadd.f32 %v242, %v226
      %v244 = vadd.f32 %v243, %v234
      %v245 = vrot.slane %v244, 4
      %v246 = vadd.f32 %v244, %v245
      %v247 = vrot.slane %v246, 2
      %v248 = vadd.f32 %v246, %v247
      %v249 = vrot.slane %v248, 1
      %v250 = vadd.f32 %v248, %v249
      %v251 = vadd.f32 %v211, %v219
      %v252 = vadd.f32 %v251, %v227
      %v253 = vadd.f32 %v252, %v235
      %v254 = vrot.slane %v253, 4
      %v255 = vadd.f32 %v253, %v254
      %v256 = vrot.slane %v255, 2
      %v257 = vadd.f32 %v255, %v256
      %v258 = vrot.slane %v257, 1
      %v259 = vadd.f32 %v257, %v258
      %v260 = vadd.f32 %v212, %v220
      %v261 = vadd.f32 %v260, %v228
      %v262 = vadd.f32 %v261, %v236
      %v263 = vrot.slane %v262, 4
      %v264 = vadd.f32 %v262, %v263
      %v265 = vrot.slane %v264, 2
      %v266 = vadd.f32 %v264, %v265
      %v267 = vrot.slane %v266, 1
      %v268 = vadd.f32 %v266, %v267
      %v269 = vadd.f32 %v213, %v221
      %v270 = vadd.f32 %v269, %v229
      %v271 = vadd.f32 %v270, %v237
      %v272 = vrot.slane %v271, 4
      %v273 = vadd.f32 %v271, %v272
      %v274 = vrot.slane %v273, 2
      %v275 = vadd.f32 %v273, %v274
      %v276 = vrot.slane %v275, 1
      %v277 = vadd.f32 %v275, %v276
      %v278 = vadd.f32 %v214, %v222
      %v279 = vadd.f32 %v278, %v230
      %v280 = vadd.f32 %v279, %v238
      %v281 = vrot.slane %v280, 4
      %v282 = vadd.f32 %v280, %v281
      %v283 = vrot.slane %v282, 2
      %v284 = vadd.f32 %v282, %v283
      %v285 = vrot.slane %v284, 1
      %v286 = vadd.f32 %v284, %v285
      %v287 = vadd.f32 %v215, %v223
      %v288 = vadd.f32 %v287, %v231
      %v289 = vadd.f32 %v288, %v239
      %v290 = vrot.slane %v289, 4
      %v291 = vadd.f32 %v289, %v290
      %v292 = vrot.slane %v291, 2
      %v293 = vadd.f32 %v291, %v292
      %v294 = vrot.slane %v293, 1
      %v295 = vadd.f32 %v293, %v294
      %v296 = vadd.f32 %v216, %v224
      %v297 = vadd.f32 %v296, %v232
      %v298 = vadd.f32 %v297, %v240
      %v299 = vrot.slane %v298, 4
      %v300 = vadd.f32 %v298, %v299
      %v301 = vrot.slane %v300, 2
      %v302 = vadd.f32 %v300, %v301
      %v303 = vrot.slane %v302, 1
      %v304 = vadd.f32 %v302, %v303
      %v305 = vadd.f32 %v217, %v225
      %v306 = vadd.f32 %v305, %v233
      %v307 = vadd.f32 %v306, %v241
      %v308 = vrot.slane %v307, 4
      %v309 = vadd.f32 %v307, %v308
      %v310 = vrot.slane %v309, 2
      %v311 = vadd.f32 %v309, %v310
      %v312 = vrot.slane %v311, 1
      %v313 = vadd.f32 %v311, %v312
      %v314 = vrcp.pop 32.0
      %v315 = vmul.f32 %v250, %v314
      %v316 = vmul.f32 %v259, %v314
      %v317 = vmul.f32 %v268, %v314
      %v318 = vmul.f32 %v277, %v314
      %v319 = vmul.f32 %v286, %v314
      %v320 = vmul.f32 %v295, %v314
      %v321 = vmul.f32 %v304, %v314
      %v322 = vmul.f32 %v313, %v314
      %v323 = vmul.f32 %v210, %v210
      %v324 = vmul.f32 %v211, %v211
      %v325 = vmul.f32 %v212, %v212
      %v326 = vmul.f32 %v213, %v213
      %v327 = vmul.f32 %v214, %v214
      %v328 = vmul.f32 %v215, %v215
      %v329 = vmul.f32 %v216, %v216
      %v330 = vmul.f32 %v217, %v217
      %v331 = vmul.f32 %v218, %v218
      %v332 = vmul.f32 %v219, %v219
      %v333 = vmul.f32 %v220, %v220
      %v334 = vmul.f32 %v221, %v221
      %v335 = vmul.f32 %v222, %v222
      %v336 = vmul.f32 %v223, %v223
      %v337 = vmul.f32 %v224, %v224
      %v338 = vmul.f32 %v225, %v225
      %v339 = vmul.f32 %v226, %v226
      %v340 = vmul.f32 %v227, %v227
      %v341 = vmul.f32 %v228, %v228
      %v342 = vmul.f32 %v229, %v229
      %v343 = vmul.f32 %v230, %v230
      %v344 = vmul.f32 %v231, %v231
      %v345 = vmul.f32 %v232, %v232
      %v346 = vmul.f32 %v233, %v233
      %v347 = vmul.f32 %v234, %v234
      %v348 = vmul.f32 %v235, %v235
      %v349 = vmul.f32 %v236, %v236
      %v350 = vmul.f32 %v237, %v237
      %v351 = vmul.f32 %v238, %v238
      %v352 = vmul.f32 %v239, %v239
      %v353 = vmul.f32 %v240, %v240
      %v354 = vmul.f32 %v241, %v241
      %v355 = vadd.f32 %v323, %v331
      %v356 = vadd.f32 %v355, %v339
      %v357 = vadd.f32 %v356, %v347
      %v358 = vrot.slane %v357, 4
      %v359 = vadd.f32 %v357, %v358
      %v360 = vrot.slane %v359, 2
      %v361 = vadd.f32 %v359, %v360
      %v362 = vrot.slane %v361, 1
      %v363 = vadd.f32 %v361, %v362
      %v364 = vadd.f32 %v324, %v332
      %v365 = vadd.f32 %v364, %v340
      %v366 = vadd.f32 %v365, %v348
      %v367 = vrot.slane %v366, 4
      %v368 = vadd.f32 %v366, %v367
      %v369 = vrot.slane %v368, 2
      %v370 = vadd.f32 %v368, %v369
      %v371 = vrot.slane %v370, 1
      %v372 = vadd.f32 %v370, %v371
      %v373 = vadd.f32 %v325, %v333
      %v374 = vadd.f32 %v373, %v341
      %v375 = vadd.f32 %v374, %v349
      %v376 = vrot.slane %v375, 4
      %v377 = vadd.f32 %v375, %v376
      %v378 = vrot.slane %v377, 2
      %v379 = vadd.f32 %v377, %v378
      %v380 = vrot.slane %v379, 1
      %v381 = vadd.f32 %v379, %v380
      %v382 = vadd.f32 %v326, %v334
      %v383 = vadd.f32 %v382, %v342
      %v384 = vadd.f32 %v383, %v350
      %v385 = vrot.slane %v384, 4
      %v386 = vadd.f32 %v384, %v385
      %v387 = vrot.slane %v386, 2
      %v388 = vadd.f32 %v386, %v387
      %v389 = vrot.slane %v388, 1
      %v390 = vadd.f32 %v388, %v389
      %v391 = vadd.f32 %v327, %v335
      %v392 = vadd.f32 %v391, %v343
      %v393 = vadd.f32 %v392, %v351
      %v394 = vrot.slane %v393, 4
      %v395 = vadd.f32 %v393, %v394
      %v396 = vrot.slane %v395, 2
      %v397 = vadd.f32 %v395, %v396
      %v398 = vrot.slane %v397, 1
      %v399 = vadd.f32 %v397, %v398
      %v400 = vadd.f32 %v328, %v336
      %v401 = vadd.f32 %v400, %v344
      %v402 = vadd.f32 %v401, %v352
      %v403 = vrot.slane %v402, 4
      %v404 = vadd.f32 %v402, %v403
      %v405 = vrot.slane %v404, 2
      %v406 = vadd.f32 %v404, %v405
      %v407 = vrot.slane %v406, 1
      %v408 = vadd.f32 %v406, %v407
      %v409 = vadd.f32 %v329, %v337
      %v410 = vadd.f32 %v409, %v345
      %v411 = vadd.f32 %v410, %v353
      %v412 = vrot.slane %v411, 4
      %v413 = vadd.f32 %v411, %v412
      %v414 = vrot.slane %v413, 2
      %v415 = vadd.f32 %v413, %v414
      %v416 = vrot.slane %v415, 1
      %v417 = vadd.f32 %v415, %v416
      %v418 = vadd.f32 %v330, %v338
      %v419 = vadd.f32 %v418, %v346
      %v420 = vadd.f32 %v419, %v354
      %v421 = vrot.slane %v420, 4
      %v422 = vadd.f32 %v420, %v421
      %v423 = vrot.slane %v422, 2
      %v424 = vadd.f32 %v422, %v423
      %v425 = vrot.slane %v424, 1
      %v426 = vadd.f32 %v424, %v425
      %v427 = vmul.f32 %v363, %v314
      %v428 = vmul.f32 %v372, %v314
      %v429 = vmul.f32 %v381, %v314
      %v430 = vmul.f32 %v390, %v314
      %v431 = vmul.f32 %v399, %v314
      %v432 = vmul.f32 %v408, %v314
      %v433 = vmul.f32 %v417, %v314
      %v434 = vmul.f32 %v426, %v314
      %v435 = vmul.f32 %v315, %v315
      %v436 = vmul.f32 %v316, %v316
      %v437 = vmul.f32 %v317, %v317
      %v438 = vmul.f32 %v318, %v318
      %v439 = vmul.f32 %v319, %v319
      %v440 = vmul.f32 %v320, %v320
      %v441 = vmul.f32 %v321, %v321
      %v442 = vmul.f32 %v322, %v322
      %v443 = vsub.f32 %v427, %v435
      %v444 = vsub.f32 %v428, %v436
      %v445 = vsub.f32 %v429, %v437
      %v446 = vsub.f32 %v430, %v438
      %v447 = vsub.f32 %v431, %v439
      %v448 = vsub.f32 %v432, %v440
      %v449 = vsub.f32 %v433, %v441
      %v450 = vsub.f32 %v434, %v442
      %v451 = vmax.f32 %v443, 0.0
      %v452 = vmax.f32 %v444, 0.0
      %v453 = vmax.f32 %v445, 0.0
      %v454 = vmax.f32 %v446, 0.0
      %v455 = vmax.f32 %v447, 0.0
      %v456 = vmax.f32 %v448, 0.0
      %v457 = vmax.f32 %v449, 0.0
      %v458 = vmax.f32 %v450, 0.0
      %v459 = vrsqrt.pop %v451
      %v460 = vmul.f32 %v451, %v459
      %vm461 = vcmp.eq.f32.partialorder %v451, inf
      %v462 = vsel %vm461, %v451, %v460
      %vm463 = vcmp.eq.f32.partialorder %v451, 0.0
      %v464 = vand.u32 %v451, 2147483648
      %v465 = vsel %vm463, %v464, %v462
      %v466 = vrsqrt.pop %v452
      %v467 = vmul.f32 %v452, %v466
      %vm468 = vcmp.eq.f32.partialorder %v452, inf
      %v469 = vsel %vm468, %v452, %v467
      %vm470 = vcmp.eq.f32.partialorder %v452, 0.0
      %v471 = vand.u32 %v452, 2147483648
      %v472 = vsel %vm470, %v471, %v469
      %v473 = vrsqrt.pop %v453
      %v474 = vmul.f32 %v453, %v473
      %vm475 = vcmp.eq.f32.partialorder %v453, inf
      %v476 = vsel %vm475, %v453, %v474
      %vm477 = vcmp.eq.f32.partialorder %v453, 0.0
      %v478 = vand.u32 %v453, 2147483648
      %v479 = vsel %vm477, %v478, %v476
      %v480 = vrsqrt.pop %v454
      %v481 = vmul.f32 %v454, %v480
      %vm482 = vcmp.eq.f32.partialorder %v454, inf
      %v483 = vsel %vm482, %v454, %v481
      %vm484 = vcmp.eq.f32.partialorder %v454, 0.0
      %v485 = vand.u32 %v454, 2147483648
      %v486 = vsel %vm484, %v485, %v483
      %v487 = vrsqrt.pop %v455
      %v488 = vmul.f32 %v455, %v487
      %vm489 = vcmp.eq.f32.partialorder %v455, inf
      %v490 = vsel %vm489, %v455, %v488
      %vm491 = vcmp.eq.f32.partialorder %v455, 0.0
      %v492 = vand.u32 %v455, 2147483648
      %v493 = vsel %vm491, %v492, %v490
      %v494 = vrsqrt.pop %v456
      %v495 = vmul.f32 %v456, %v494
      %vm496 = vcmp.eq.f32.partialorder %v456, inf
      %v497 = vsel %vm496, %v456, %v495
      %vm498 = vcmp.eq.f32.partialorder %v456, 0.0
      %v499 = vand.u32 %v456, 2147483648
      %v500 = vsel %vm498, %v499, %v497
      %v501 = vrsqrt.pop %v457
      %v502 = vmul.f32 %v457, %v501
      %vm503 = vcmp.eq.f32.partialorder %v457, inf
      %v504 = vsel %vm503, %v457, %v502
      %vm505 = vcmp.eq.f32.partialorder %v457, 0.0
      %v506 = vand.u32 %v457, 2147483648
      %v507 = vsel %vm505, %v506, %v504
      %v508 = vrsqrt.pop %v458
      %v509 = vmul.f32 %v458, %v508
      %vm510 = vcmp.eq.f32.partialorder %v458, inf
      %v511 = vsel %vm510, %v458, %v509
      %vm512 = vcmp.eq.f32.partialorder %v458, 0.0
      %v513 = vand.u32 %v458, 2147483648
      %v514 = vsel %vm512, %v513, %v511
      %v515 = vadd.f32 %v465, 1e-05
      %v516 = vadd.f32 %v472, 1e-05
      %v517 = vadd.f32 %v479, 1e-05
      %v518 = vadd.f32 %v486, 1e-05
      %v519 = vadd.f32 %v493, 1e-05
      %v520 = vadd.f32 %v500, 1e-05
      %v521 = vadd.f32 %v507, 1e-05
      %v522 = vadd.f32 %v514, 1e-05
      %v523 = vrcp.pop %v515
      %v524 = vrcp.pop %v516
      %v525 = vrcp.pop %v517
      %v526 = vrcp.pop %v518
      %v527 = vrcp.pop %v519
      %v528 = vrcp.pop %v520
      %v529 = vrcp.pop %v521
      %v530 = vrcp.pop %v522
      %v531 = vsub.f32 %v210, %v315
      %v532 = vsub.f32 %v211, %v316
      %v533 = vsub.f32 %v212, %v317
      %v534 = vsub.f32 %v213, %v318
      %v535 = vsub.f32 %v214, %v319
      %v536 = vsub.f32 %v215, %v320
      %v537 = vsub.f32 %v216, %v321
      %v538 = vsub.f32 %v217, %v322
      %v539 = vsub.f32 %v218, %v315
      %v540 = vsub.f32 %v219, %v316
      %v541 = vsub.f32 %v220, %v317
      %v542 = vsub.f32 %v221, %v318
      %v543 = vsub.f32 %v222, %v319
      %v544 = vsub.f32 %v223, %v320
      %v545 = vsub.f32 %v224, %v321
      %v546 = vsub.f32 %v225, %v322
      %v547 = vsub.f32 %v226, %v315
      %v548 = vsub.f32 %v227, %v316
      %v549 = vsub.f32 %v228, %v317
      %v550 = vsub.f32 %v229, %v318
      %v551 = vsub.f32 %v230, %v319
      %v552 = vsub.f32 %v231, %v320
      %v553 = vsub.f32 %v232, %v321
      %v554 = vsub.f32 %v233, %v322
      %v555 = vsub.f32 %v234, %v315
      %v556 = vsub.f32 %v235, %v316
      %v557 = vsub.f32 %v236, %v317
      %v558 = vsub.f32 %v237, %v318
      %v559 = vsub.f32 %v238, %v319
      %v560 = vsub.f32 %v239, %v320
      %v561 = vsub.f32 %v240, %v321
      %v562 = vsub.f32 %v241, %v322
      %v563 = vmul.f32 %v531, %v523
      %v564 = vmul.f32 %v532, %v524
      %v565 = vmul.f32 %v533, %v525
      %v566 = vmul.f32 %v534, %v526
      %v567 = vmul.f32 %v535, %v527
      %v568 = vmul.f32 %v536, %v528
      %v569 = vmul.f32 %v537, %v529
      %v570 = vmul.f32 %v538, %v530
      %v571 = vmul.f32 %v539, %v523
      %v572 = vmul.f32 %v540, %v524
      %v573 = vmul.f32 %v541, %v525
      %v574 = vmul.f32 %v542, %v526
      %v575 = vmul.f32 %v543, %v527
      %v576 = vmul.f32 %v544, %v528
      %v577 = vmul.f32 %v545, %v529
      %v578 = vmul.f32 %v546, %v530
      %v579 = vmul.f32 %v547, %v523
      %v580 = vmul.f32 %v548, %v524
      %v581 = vmul.f32 %v549, %v525
      %v582 = vmul.f32 %v550, %v526
      %v583 = vmul.f32 %v551, %v527
      %v584 = vmul.f32 %v552, %v528
      %v585 = vmul.f32 %v553, %v529
      %v586 = vmul.f32 %v554, %v530
      %v587 = vmul.f32 %v555, %v523
      %v588 = vmul.f32 %v556, %v524
      %v589 = vmul.f32 %v557, %v525
      %v590 = vmul.f32 %v558, %v526
      %v591 = vmul.f32 %v559, %v527
      %v592 = vmul.f32 %v560, %v528
      %v593 = vmul.f32 %v561, %v529
      %v594 = vmul.f32 %v562, %v530
      %v595 = vld [vmem:[%s1] sm:$0xff]
      %v596 = vld [vmem:[%s1 + $0x8] sm:$0xff]
      %v597 = vld [vmem:[%s1 + $0x10] sm:$0xff]
      %v598 = vld [vmem:[%s1 + $0x18] sm:$0xff]
      %600 = vset.pattern.permute.xlu0 0
      %601 = vperm.xlu0 %600, %v595
      %v602 = vpop.permute.xlu0 %601
      %605 = vset.pattern.permute.xlu0 0
      %606 = vperm.xlu0 %605, %v596
      %v607 = vpop.permute.xlu0 %606
      %610 = vset.pattern.permute.xlu0 0
      %611 = vperm.xlu0 %610, %v597
      %v612 = vpop.permute.xlu0 %611
      %615 = vset.pattern.permute.xlu0 0
      %616 = vperm.xlu0 %615, %v598
      %v617 = vpop.permute.xlu0 %616
      %v619 = vmul.f32 %v563, %v602
      %v620 = vmul.f32 %v564, %v602
      %v621 = vmul.f32 %v565, %v602
      %v622 = vmul.f32 %v566, %v602
      %v623 = vmul.f32 %v567, %v602
      %v624 = vmul.f32 %v568, %v602
      %v625 = vmul.f32 %v569, %v602
      %v626 = vmul.f32 %v570, %v602
      %v627 = vmul.f32 %v571, %v607
      %v628 = vmul.f32 %v572, %v607
      %v629 = vmul.f32 %v573, %v607
      %v630 = vmul.f32 %v574, %v607
      %v631 = vmul.f32 %v575, %v607
      %v632 = vmul.f32 %v576, %v607
      %v633 = vmul.f32 %v577, %v607
      %v634 = vmul.f32 %v578, %v607
      %v635 = vmul.f32 %v579, %v612
      %v636 = vmul.f32 %v580, %v612
      %v637 = vmul.f32 %v581, %v612
      %v638 = vmul.f32 %v582, %v612
      %v639 = vmul.f32 %v583, %v612
      %v640 = vmul.f32 %v584, %v612
      %v641 = vmul.f32 %v585, %v612
      %v642 = vmul.f32 %v586, %v612
      %v643 = vmul.f32 %v587, %v617
      %v644 = vmul.f32 %v588, %v617
      %v645 = vmul.f32 %v589, %v617
      %v646 = vmul.f32 %v590, %v617
      %v647 = vmul.f32 %v591, %v617
      %v648 = vmul.f32 %v592, %v617
      %v649 = vmul.f32 %v593, %v617
      %v650 = vmul.f32 %v594, %v617
      %v651 = vld [vmem:[%s2] sm:$0xff]
      %v652 = vld [vmem:[%s2 + $0x8] sm:$0xff]
      %v653 = vld [vmem:[%s2 + $0x10] sm:$0xff]
      %v654 = vld [vmem:[%s2 + $0x18] sm:$0xff]
      %656 = vset.pattern.permute.xlu0 0
      %657 = vperm.xlu0 %656, %v651
      %v658 = vpop.permute.xlu0 %657
      %661 = vset.pattern.permute.xlu0 0
      %662 = vperm.xlu0 %661, %v652
      %v663 = vpop.permute.xlu0 %662
      %666 = vset.pattern.permute.xlu0 0
      %667 = vperm.xlu0 %666, %v653
      %v668 = vpop.permute.xlu0 %667
      %671 = vset.pattern.permute.xlu0 0
      %672 = vperm.xlu0 %671, %v654
      %v673 = vpop.permute.xlu0 %672
      %v675 = vadd.f32 %v619, %v658
      %v676 = vadd.f32 %v620, %v658
      %v677 = vadd.f32 %v621, %v658
      %v678 = vadd.f32 %v622, %v658
      %v679 = vadd.f32 %v623, %v658
      %v680 = vadd.f32 %v624, %v658
      %v681 = vadd.f32 %v625, %v658
      %v682 = vadd.f32 %v626, %v658
      %v683 = vadd.f32 %v627, %v663
      %v684 = vadd.f32 %v628, %v663
      %v685 = vadd.f32 %v629, %v663
      %v686 = vadd.f32 %v630, %v663
      %v687 = vadd.f32 %v631, %v663
      %v688 = vadd.f32 %v632, %v663
      %v689 = vadd.f32 %v633, %v663
      %v690 = vadd.f32 %v634, %v663
      %v691 = vadd.f32 %v635, %v668
      %v692 = vadd.f32 %v636, %v668
      %v693 = vadd.f32 %v637, %v668
      %v694 = vadd.f32 %v638, %v668
      %v695 = vadd.f32 %v639, %v668
      %v696 = vadd.f32 %v640, %v668
      %v697 = vadd.f32 %v641, %v668
      %v698 = vadd.f32 %v642, %v668
      %v699 = vadd.f32 %v643, %v673
      %v700 = vadd.f32 %v644, %v673
      %v701 = vadd.f32 %v645, %v673
      %v702 = vadd.f32 %v646, %v673
      %v703 = vadd.f32 %v647, %v673
      %v704 = vadd.f32 %v648, %v673
      %v705 = vadd.f32 %v649, %v673
      %v706 = vadd.f32 %v650, %v673
      %707 = vst [vmem:[%s208] sm:$0xff] %v675
      %708 = vst [vmem:[%s208 + $0x8] sm:$0xff] %v676
      %709 = vst [vmem:[%s208 + $0x10] sm:$0xff] %v677
      %710 = vst [vmem:[%s208 + $0x18] sm:$0xff] %v678
      %711 = vst [vmem:[%s208 + $0x20] sm:$0xff] %v679
      %712 = vst [vmem:[%s208 + $0x28] sm:$0xff] %v680
      %713 = vst [vmem:[%s208 + $0x30] sm:$0xff] %v681
      %714 = vst [vmem:[%s208 + $0x38] sm:$0xff] %v682
      %715 = vst [vmem:[%s208 + $0x40] sm:$0xff] %v683
      %716 = vst [vmem:[%s208 + $0x48] sm:$0xff] %v684
      %717 = vst [vmem:[%s208 + $0x50] sm:$0xff] %v685
      %718 = vst [vmem:[%s208 + $0x58] sm:$0xff] %v686
      %719 = vst [vmem:[%s208 + $0x60] sm:$0xff] %v687
      %720 = vst [vmem:[%s208 + $0x68] sm:$0xff] %v688
      %721 = vst [vmem:[%s208 + $0x70] sm:$0xff] %v689
      %722 = vst [vmem:[%s208 + $0x78] sm:$0xff] %v690
      %723 = vst [vmem:[%s208 + $0x80] sm:$0xff] %v691
      %724 = vst [vmem:[%s208 + $0x88] sm:$0xff] %v692
      %725 = vst [vmem:[%s208 + $0x90] sm:$0xff] %v693
      %726 = vst [vmem:[%s208 + $0x98] sm:$0xff] %v694
      %727 = vst [vmem:[%s208 + $0xa0] sm:$0xff] %v695
      %728 = vst [vmem:[%s208 + $0xa8] sm:$0xff] %v696
      %729 = vst [vmem:[%s208 + $0xb0] sm:$0xff] %v697
      %730 = vst [vmem:[%s208 + $0xb8] sm:$0xff] %v698
      %731 = vst [vmem:[%s208 + $0xc0] sm:$0xff] %v699
      %732 = vst [vmem:[%s208 + $0xc8] sm:$0xff] %v700
      %733 = vst [vmem:[%s208 + $0xd0] sm:$0xff] %v701
      %734 = vst [vmem:[%s208 + $0xd8] sm:$0xff] %v702
      %735 = vst [vmem:[%s208 + $0xe0] sm:$0xff] %v703
      %736 = vst [vmem:[%s208 + $0xe8] sm:$0xff] %v704
      %737 = vst [vmem:[%s208 + $0xf0] sm:$0xff] %v705
      %738 = vst [vmem:[%s208 + $0xf8] sm:$0xff] %v706
      %s739 = smul.u32 8, %s19
      %p740 = scmp.lt.s32.totalorder %s18, 1
      %s741 = scalar_select %p740, %s18, 1
      %p742 = scmp.lt.s32.totalorder %s739, 7
      %s743 = scalar_select %p742, %s739, 7
      %s744 = smul.addr %s741, 32
      %s745 = sadd.s32 %s743, %s744
      %s746 = smul.addr %s745, 8
      %s747 = scalar_lea.vmem %s3, %s746
      // Predicated region
      $region33: #{_lambda_.1} parent=31 // pred_check
        %p748 = pneg %p116
      $region34: #{_lambda_.1} parent=31 // pred_check_branch
        %750 = sbr.rel (%p748) target = $region36
      $region35: #{_lambda_.1} parent=31 // pred_region
        %s751 = smul.u32 8, %s19
      $region36: #{_lambda_.1} parent=31 // pred_fallthru
        _
    $region32: #{_lambda_.1} parent=5 // pred_fallthru
      _
    %p752 = scmp.le.s32.totalorder 2, %s9
    // Predicated region
    $region37: #{_lambda_.1} parent=5 // pred_check
      %p753 = pneg %p752
    $region38: #{_lambda_.1} parent=5 // pred_check_branch
      %755 = sbr.rel (%p753) target = $region40
    $region39: #{_lambda_.1} parent=5 // pred_region
      %s756 = ssub.s32 %s9, 2
      // Predicated region
      $region41: #{_lambda_.1} parent=39 // pred_check
        %p757 = pneg %p122
      $region42: #{_lambda_.1} parent=39 // pred_check_branch
        %759 = sbr.rel (%p757) target = $region44
      $region43: #{_lambda_.1} parent=39 // pred_region
        %s760 = smul.u32 8, %s21
        %p761 = scmp.lt.s32.totalorder %s20, 1
        %s762 = scalar_select %p761, %s20, 1
        %p763 = scmp.lt.s32.totalorder %s760, 7
        %s764 = scalar_select %p763, %s760, 7
        %s765 = smul.addr %s762, 32
        %s766 = sadd.s32 %s764, %s765
        %s767 = smul.addr %s766, 8
        %s768 = scalar_lea.vmem %s3, %s767
      $region44: #{_lambda_.1} parent=39 // pred_fallthru
        _
    $region40: #{_lambda_.1} parent=5 // pred_fallthru
      _
  $region6: #{_lambda_.1} parent=0 // loop_footer
    %s13 = sadd.s32 1, %s9
  $region7: #{_lambda_.1} parent=0 // loop_footer_branch
    %8 = sbr.rel target = $region3
  $region8: #{_lambda_.1} parent=0 // loop_exit
    _

</llo_original>
